<compile_context>
chip_gen: v7x
topology: tpu7x:2x2x1
jax: 0.10.0
libtpu: 0.0.40
codegen_flags: <defaults>
</compile_context>

<pallas_src>
import functools

import jax
import jax.numpy as jnp
from jax.experimental import pallas as pl
from jax.experimental.pallas import tpu as pltpu


def gru_cell_kernel(x_ref, h_ref, w_ref, b_ref, out_ref, *, input_size, hidden_size):
    I, H = input_size, hidden_size

    x = x_ref[...].astype(jnp.float32)          # (B, I)
    h = h_ref[...].astype(jnp.float32)          # (B, H)
    w = w_ref[...].astype(jnp.float32)          # (I + H, 4H) packed
    b = b_ref[...].astype(jnp.float32)          # (1, 4H) packed (zeros on U_h block)

    # One fused gate slab (B, 4H): two MXU passes over one packed weight.
    g = (jnp.dot(x, w[:I, :], preferred_element_type=jnp.float32)
         + jnp.dot(h, w[I:, :], preferred_element_type=jnp.float32)
         + b)

    r = jax.nn.sigmoid(g[:, 0:H])                       # W_r x + b_r + U_r h
    z = jax.nn.sigmoid(g[:, H:2 * H])                   # W_z x + b_z + U_z h
    h_tilde = jnp.tanh(g[:, 2 * H:3 * H]                # W_h x + b_h
                       + r * g[:, 3 * H:4 * H])         # + r * (U_h h)

    h_t = (1.0 - z) * h + z * h_tilde
    out_ref[...] = h_t.astype(out_ref.dtype)


def pack_params(params, input_size, hidden_size, dtype=jnp.float32):
    """One-time packing (do this OUTSIDE the per-step call).

    Returns:
      w_packed: (I + H, 4H) in x @ W layout:
                rows [0:I)   = [W_r.T | W_z.T | W_h.T | 0   ]
                rows [I:I+H) = [U_r.T | U_z.T | 0     | U_h.T]
      b_packed: (1, 4H) = [b_r | b_z | b_h | 0]
    """
    I, H = input_size, hidden_size
    wx = jnp.concatenate(
        [params["W_r"].T, params["W_z"].T, params["W_h"].T,
         jnp.zeros((I, H), dtype)], axis=1)
    wh = jnp.concatenate(
        [params["U_r"].T, params["U_z"].T,
         jnp.zeros((H, H), dtype), params["U_h"].T], axis=1)
    w_packed = jnp.concatenate([wx, wh], axis=0).astype(dtype)      # (I+H, 4H)
    b_packed = jnp.concatenate(
        [params["b_r"], params["b_z"], params["b_h"],
         jnp.zeros((H,), dtype)]).reshape(1, 4 * H).astype(dtype)   # (1, 4H)
    return w_packed, b_packed


def gru_cell(x, h_prev, w_packed, b_packed):
    """Single GRU cell step. w_packed/b_packed come from pack_params (done once)."""
    B, I = x.shape
    H = h_prev.shape[1]
    assert w_packed.shape == (I + H, 4 * H)
    assert b_packed.shape == (1, 4 * H)

    kernel = functools.partial(gru_cell_kernel, input_size=I, hidden_size=H)
    vmem = pl.BlockSpec(memory_space=pltpu.VMEM)
    return pl.pallas_call(
        kernel,
        out_shape=jax.ShapeDtypeStruct((B, H), x.dtype),
        in_specs=[vmem, vmem, vmem, vmem],
        out_specs=vmem,
    )(x, h_prev, w_packed, b_packed)


def init_params(key, input_size, hidden_size, dtype=jnp.float32):
    """Deterministic init matching nn.Linear's U(-1/sqrt(fan_in), 1/sqrt(fan_in)).
    Kept in PyTorch layout (out_features, in_features); packed once by pack_params."""
    ks = jax.random.split(key, 9)
    bx = 1.0 / jnp.sqrt(jnp.float32(input_size))
    bh = 1.0 / jnp.sqrt(jnp.float32(hidden_size))
    u = lambda k, shape, b: jax.random.uniform(k, shape, dtype, minval=-b, maxval=b)
    return {
        "W_z": u(ks[0], (hidden_size, input_size), bx),
        "b_z": u(ks[1], (hidden_size,), bx),
        "U_z": u(ks[2], (hidden_size, hidden_size), bh),
        "W_r": u(ks[3], (hidden_size, input_size), bx),
        "b_r": u(ks[4], (hidden_size,), bx),
        "U_r": u(ks[5], (hidden_size, hidden_size), bh),
        "W_h": u(ks[6], (hidden_size, input_size), bx),
        "b_h": u(ks[7], (hidden_size,), bx),
        "U_h": u(ks[8], (hidden_size, hidden_size), bh),
    }


def gru_cell_ref(x, h_prev, p):
    """Pure-JAX reference mirroring the PyTorch forward (unfused)."""
    lin = lambda v, W, b=None: v @ W.T + (0.0 if b is None else b)
    r = jax.nn.sigmoid(lin(x, p["W_r"], p["b_r"]) + lin(h_prev, p["U_r"]))
    z = jax.nn.sigmoid(lin(x, p["W_z"], p["b_z"]) + lin(h_prev, p["U_z"]))
    h_tilde = jnp.tanh(lin(x, p["W_h"], p["b_h"]) + r * lin(h_prev, p["U_h"]))
    return (1.0 - z) * h_prev + z * h_tilde


if __name__ == "__main__":
    B, INPUT, HIDDEN = 8, 64, 32

    key = jax.random.PRNGKey(0)
    k_x, k_h, k_p = jax.random.split(key, 3)

    x = jax.random.normal(k_x, (B, INPUT), jnp.float32)
    h_prev = jax.random.normal(k_h, (B, HIDDEN), jnp.float32)
    params = init_params(k_p, INPUT, HIDDEN)

    # One-time weight packing (no per-call transposes / concats).
    w_packed, b_packed = jax.block_until_ready(
        pack_params(params, INPUT, HIDDEN))

    h_t = jax.block_until_ready(gru_cell(x, h_prev, w_packed, b_packed))

    h_ref = gru_cell_ref(x, h_prev, params)
    assert h_t.shape == (B, HIDDEN)
    assert jnp.allclose(h_t, h_ref, atol=1e-5, rtol=1e-5), "mismatch vs reference"

    print("KERNEL_OK")
</pallas_src>

<mosaic_0001>
module attributes {stable_mosaic.version = 11 : i64} {
  func.func @gru_cell_kernel(%arg0: memref<8x64xf32, #tpu.memory_space<vmem>>, %arg1: memref<8x32xf32, #tpu.memory_space<vmem>>, %arg2: memref<96x128xf32, #tpu.memory_space<vmem>>, %arg3: memref<1x128xf32, #tpu.memory_space<vmem>>, %arg4: memref<8x32xf32, #tpu.memory_space<vmem>>) attributes {dimension_semantics = [], scalar_prefetch = 0 : i64, scratch_operands = 0 : i64, tpu.core_type = #tpu.core_type<tc>} {
    %c0 = arith.constant 0 : index
    %c0_0 = arith.constant 0 : index
    %0 = vector.load %arg0[%c0, %c0_0] : memref<8x64xf32, #tpu.memory_space<vmem>>, vector<8x64xf32>
    %c0_1 = arith.constant 0 : index
    %c0_2 = arith.constant 0 : index
    %1 = vector.load %arg1[%c0_1, %c0_2] : memref<8x32xf32, #tpu.memory_space<vmem>>, vector<8x32xf32>
    %c0_3 = arith.constant 0 : index
    %c0_4 = arith.constant 0 : index
    %2 = vector.load %arg2[%c0_3, %c0_4] : memref<96x128xf32, #tpu.memory_space<vmem>>, vector<96x128xf32>
    %c0_5 = arith.constant 0 : index
    %c0_6 = arith.constant 0 : index
    %3 = vector.load %arg3[%c0_5, %c0_6] : memref<1x128xf32, #tpu.memory_space<vmem>>, vector<1x128xf32>
    %4 = vector.extract_strided_slice %2 {offsets = [0, 0], sizes = [64, 128], strides = [1, 1]} : vector<96x128xf32> to vector<64x128xf32>
    %cst = arith.constant dense<0.000000e+00> : vector<8x128xf32>
    %5 = tpu.matmul %0, %4, %cst {dimension_numbers = #tpu.dot_dimension_numbers<[1], [0], [0], [1], [0, 0, 1, 1], [], []>} : vector<8x64xf32>, vector<64x128xf32>, vector<8x128xf32> -> vector<8x128xf32>
    %6 = vector.extract_strided_slice %2 {offsets = [64, 0], sizes = [32, 128], strides = [1, 1]} : vector<96x128xf32> to vector<32x128xf32>
    %cst_7 = arith.constant dense<0.000000e+00> : vector<8x128xf32>
    %7 = tpu.matmul %1, %6, %cst_7 {dimension_numbers = #tpu.dot_dimension_numbers<[1], [0], [0], [1], [0, 0, 1, 1], [], []>} : vector<8x32xf32>, vector<32x128xf32>, vector<8x128xf32> -> vector<8x128xf32>
    %8 = arith.addf %5, %7 : vector<8x128xf32>
    %9 = vector.broadcast %3 : vector<1x128xf32> to vector<8x128xf32>
    %10 = arith.addf %8, %9 : vector<8x128xf32>
    %11 = vector.extract_strided_slice %10 {offsets = [0, 0], sizes = [8, 32], strides = [1, 1]} : vector<8x128xf32> to vector<8x32xf32>
    %12 = arith.negf %11 : vector<8x32xf32>
    %13 = math.exp %12 : vector<8x32xf32>
    %cst_8 = arith.constant 1.000000e+00 : f32
    %14 = vector.broadcast %cst_8 : f32 to vector<8x32xf32>
    %15 = arith.addf %14, %13 : vector<8x32xf32>
    %16 = arith.divf %14, %15 : vector<8x32xf32>
    %17 = vector.extract_strided_slice %10 {offsets = [0, 32], sizes = [8, 32], strides = [1, 1]} : vector<8x128xf32> to vector<8x32xf32>
    %18 = arith.negf %17 : vector<8x32xf32>
    %19 = math.exp %18 : vector<8x32xf32>
    %cst_9 = arith.constant 1.000000e+00 : f32
    %20 = vector.broadcast %cst_9 : f32 to vector<8x32xf32>
    %21 = arith.addf %20, %19 : vector<8x32xf32>
    %22 = arith.divf %20, %21 : vector<8x32xf32>
    %23 = vector.extract_strided_slice %10 {offsets = [0, 64], sizes = [8, 32], strides = [1, 1]} : vector<8x128xf32> to vector<8x32xf32>
    %24 = vector.extract_strided_slice %10 {offsets = [0, 96], sizes = [8, 32], strides = [1, 1]} : vector<8x128xf32> to vector<8x32xf32>
    %25 = arith.mulf %16, %24 : vector<8x32xf32>
    %26 = arith.addf %23, %25 : vector<8x32xf32>
    %27 = math.tanh %26 : vector<8x32xf32>
    %cst_10 = arith.constant 1.000000e+00 : f32
    %28 = vector.broadcast %cst_10 : f32 to vector<8x32xf32>
    %29 = arith.subf %28, %22 : vector<8x32xf32>
    %30 = arith.mulf %29, %1 : vector<8x32xf32>
    %31 = arith.mulf %22, %27 : vector<8x32xf32>
    %32 = arith.addf %30, %31 : vector<8x32xf32>
    %c0_11 = arith.constant 0 : index
    %c0_12 = arith.constant 0 : index
    %33 = vector.load %arg4[%c0_11, %c0_12] : memref<8x32xf32, #tpu.memory_space<vmem>>, vector<8x32xf32>
    tpu.vector_store %arg4[%c0_11, %c0_12], %32 {strides = array<i32>} : memref<8x32xf32, #tpu.memory_space<vmem>>, vector<8x32xf32>,
    return
  }
}

</mosaic_0001>

<llo_original>
// kernel: tpu_custom_call.1
$region0: #{tpu_custom_call.1}
  #allocation0 [shape = 'u32[]', space=smem, size = 0x4, offset = 0x4, fixed_abs, tag = 'smem constant byte address 0x4 - core index']
  #allocation1 [shape = 'u32[144,128]{1,0:T(1,128)}', space=vmem, size = 0x12000, scoped, tag = 'internal scratch']
  %s0 = inlined_call_operand.hbm [shape: f32[8,64], index: 0, kind: input, shape index: {}]
  %s1 = inlined_call_operand.hbm [shape: f32[8,32], index: 1, kind: input, shape index: {}]
  %s2 = inlined_call_operand.hbm [shape: f32[96,128], index: 2, kind: input, shape index: {}]
  %s3 = inlined_call_operand.vmem [shape: f32[1,128], index: 3, kind: input, shape index: {}]
  %s4 = inlined_call_operand.hbm [shape: f32[8,32], index: 4, kind: output, shape index: {}]
  %s5 = sld [smem:[#allocation0]]
  $region38: #{tpu_custom_call.1} parent=0
    _
  %s7 = ssub.s32 1, %s5
  %s8 = scalar_select 0, %s7, %s5
  $region1: #{tpu_custom_call.1} parent=0
    #allocation2 [shape = 'u8[4096]{0}', space=vmem, size = 0x1000, scoped, tag = 'input window, operand 0, single buffered']
    #allocation3 [shape = 's32[1]{0}', space=sflag, size = 0x4, scoped, tag = 'scoped memory for tpu_custom_call.1']
    #allocation4 [shape = 's32[1]{0}', space=sflag, size = 0x4, scoped, tag = 'scoped memory for tpu_custom_call.1']
    #allocation5 [shape = 'u8[4096]{0}', space=vmem, size = 0x1000, scoped, tag = 'input window, operand 1, single buffered']
    #allocation6 [shape = 's32[1]{0}', space=sflag, size = 0x4, scoped, tag = 'scoped memory for tpu_custom_call.1']
    #allocation7 [shape = 'u8[49152]{0}', space=vmem, size = 0xc000, scoped, tag = 'input window, operand 2, single buffered']
    #allocation8 [shape = 'u8[4096]{0}', space=vmem, size = 0x1000, scoped, tag = 'output window, operand 0, single buffered']
    %9 = vsyncpa [#allocation3], 0
    %10 = vsyncpa [#allocation6], 0
    %11 = vsyncpa [#allocation4], 0
    // Predicated region
    $region2: #{tpu_custom_call.1} parent=1 // pred_check
      _
    $region3: #{tpu_custom_call.1} parent=1 // pred_check_branch
      %13 = sbr.rel (0) target = $region5
    $region4: #{tpu_custom_call.1} parent=1 // pred_region
      %s15 = ssub.s32 128, 128
      %16 = vsyncadd [#allocation3], %s15
      %s18 = sshll.u32 [#allocation2], 4
      %s19 = int_to_ptr.vmem [resolvable:$true] %s18
      %21 = dma.hbm_to_vmem [thread:$0]  %s0, 128, %s19, [#allocation3]
    $region5: #{tpu_custom_call.1} parent=1 // pred_fallthru
      _
    // Predicated region
    $region6: #{tpu_custom_call.1} parent=1 // pred_check
      _
    $region7: #{tpu_custom_call.1} parent=1 // pred_check_branch
      %23 = sbr.rel (0) target = $region9
    $region8: #{tpu_custom_call.1} parent=1 // pred_region
      %s25 = ssub.s32 128, 128
      %26 = vsyncadd [#allocation6], %s25
      %s28 = sshll.u32 [#allocation5], 4
      %s29 = int_to_ptr.vmem [resolvable:$true] %s28
      %31 = dma.hbm_to_vmem [thread:$0]  %s1, 128, %s29, [#allocation6]
    $region9: #{tpu_custom_call.1} parent=1 // pred_fallthru
      _
    // Predicated region
    $region10: #{tpu_custom_call.1} parent=1 // pred_check
      _
    $region11: #{tpu_custom_call.1} parent=1 // pred_check_branch
      %33 = sbr.rel (0) target = $region13
    $region12: #{tpu_custom_call.1} parent=1 // pred_region
      %s35 = ssub.s32 1536, 1536
      %36 = vsyncadd [#allocation6], %s35
      %s37 = sshll.u32 [#allocation7], 4
      %s38 = int_to_ptr.vmem [resolvable:$true] %s37
      %43 = dma.hbm_to_vmem [thread:$0]  %s2, 1536, %s38, [#allocation6], 128, 128, 8
    $region13: #{tpu_custom_call.1} parent=1 // pred_fallthru
      _
    // Predicated region
    $region14: #{tpu_custom_call.1} parent=1 // pred_check
      _
    $region15: #{tpu_custom_call.1} parent=1 // pred_check_branch
      %45 = sbr.rel (0) target = $region17
    $region16: #{tpu_custom_call.1} parent=1 // pred_region
      _
    $region17: #{tpu_custom_call.1} parent=1 // pred_fallthru
      _
    // Predicated region
    $region18: #{tpu_custom_call.1} parent=1 // pred_check
      _
    $region19: #{tpu_custom_call.1} parent=1 // pred_check_branch
      %47 = sbr.rel (0) target = $region21
    $region20: #{tpu_custom_call.1} parent=1 // pred_region
      %48 = dma.done [#allocation3], 128
    $region21: #{tpu_custom_call.1} parent=1 // pred_fallthru
      _
    // Predicated region
    $region22: #{tpu_custom_call.1} parent=1 // pred_check
      _
    $region23: #{tpu_custom_call.1} parent=1 // pred_check_branch
      %50 = sbr.rel (0) target = $region25
    $region24: #{tpu_custom_call.1} parent=1 // pred_region
      %51 = dma.done [#allocation6], 128
    $region25: #{tpu_custom_call.1} parent=1 // pred_fallthru
      _
    // Predicated region
    $region26: #{tpu_custom_call.1} parent=1 // pred_check
      _
    $region27: #{tpu_custom_call.1} parent=1 // pred_check_branch
      %53 = sbr.rel (0) target = $region29
    $region28: #{tpu_custom_call.1} parent=1 // pred_region
      %54 = dma.done [#allocation6], 1536
    $region29: #{tpu_custom_call.1} parent=1 // pred_fallthru
      _
    %v55 = vld [vmem:[#allocation2] sm:$0xff]
    %v56 = vld [vmem:[#allocation5] sm:$0xff]
    %v57 = vld [vmem:[#allocation7] sm:$0xff]
    %v58 = vld [vmem:[#allocation7 + $0x8] sm:$0xff]
    %v59 = vld [vmem:[#allocation7 + $0x10] sm:$0xff]
    %v60 = vld [vmem:[#allocation7 + $0x18] sm:$0xff]
    %v61 = vld [vmem:[#allocation7 + $0x20] sm:$0xff]
    %v62 = vld [vmem:[#allocation7 + $0x28] sm:$0xff]
    %v63 = vld [vmem:[#allocation7 + $0x30] sm:$0xff]
    %v64 = vld [vmem:[#allocation7 + $0x38] sm:$0xff]
    %v65 = vld [vmem:[#allocation7 + $0x40] sm:$0xff]
    %v66 = vld [vmem:[#allocation7 + $0x48] sm:$0xff]
    %v67 = vld [vmem:[#allocation7 + $0x50] sm:$0xff]
    %v68 = vld [vmem:[#allocation7 + $0x58] sm:$0xff]
    %v69 = vld [vmem:[%s3] sm:$0x1]
    %vm70 = vcmask 261120
    %v72 = vsel %vm70, %v56, 0
    %74 = vmatprep.subr.mxu0 0.0
    %75 = vmatpush1.msra.mxu0 %v65
    %76 = vmatprep.subr.mxu0 0.0
    %77 = vmatpush1.msra.mxu0 %v66
    %78 = vmatprep.subr.mxu0 0.0
    %79 = vmatpush1.msra.mxu0 %v67
    %80 = vmatprep.subr.mxu0 0.0
    %81 = vmatpush1.msra.mxu0 %v68
    %82 = vmatprep.subr.mxu0 0.0
    %83 = vmatpush1.msra.mxu0 0.0
    %84 = vmatprep.subr.mxu0 0.0
    %85 = vmatpush1.msra.mxu0 0.0
    %86 = vmatprep.subr.mxu0 0.0
    %87 = vmatpush1.msra.mxu0 0.0
    %88 = vmatprep.subr.mxu0 0.0
    %89 = vmatpush1.msra.mxu0 0.0
    %90 = vmatprep.subr.mxu0 0.0
    %91 = vmatpush1.msra.mxu0 0.0
    %92 = vmatprep.subr.mxu0 0.0
    %93 = vmatpush1.msra.mxu0 0.0
    %94 = vmatprep.subr.mxu0 0.0
    %95 = vmatpush1.msra.mxu0 0.0
    %96 = vmatprep.subr.mxu0 0.0
    %97 = vmatpush1.msra.mxu0 0.0
    %98 = vmatprep.subr.mxu0 0.0
    %99 = vmatpush1.msra.mxu0 0.0
    %100 = vmatprep.subr.mxu0 0.0
    %101 = vmatpush1.msra.mxu0 0.0
    %102 = vmatprep.subr.mxu0 0.0
    %103 = vmatpush1.msra.mxu0 0.0
    %104 = vmatprep.subr.mxu0 0.0
    %105 = vmatpush1.msra.mxu0 0.0
    %106 = vmatprep.subr.mxu0 0.0
    %107 = vmatpush1.msra.mxu0 0.0
    %108 = vmatprep.subr.mxu0 0.0
    %109 = vmatpush1.msra.mxu0 0.0
    %110 = vmatprep.subr.mxu0 0.0
    %111 = vmatpush1.msra.mxu0 0.0
    %112 = vmatprep.subr.mxu0 0.0
    %113 = vmatpush1.msra.mxu0 0.0
    %114 = vmatprep.subr.mxu0 0.0
    %115 = vmatpush1.msra.mxu0 0.0
    %116 = vmatprep.subr.mxu0 0.0
    %117 = vmatpush1.msra.mxu0 0.0
    %118 = vmatprep.subr.mxu0 0.0
    %119 = vmatpush1.msra.mxu0 0.0
    %120 = vmatprep.subr.mxu0 0.0
    %121 = vmatpush1.msra.mxu0 0.0
    %122 = vmatprep.subr.mxu0 0.0
    %123 = vmatpush1.msra.mxu0 0.0
    %124 = vmatprep.subr.mxu0 0.0
    %125 = vmatpush1.msra.mxu0 0.0
    %126 = vmatprep.subr.mxu0 0.0
    %127 = vmatpush1.msra.mxu0 0.0
    %128 = vmatprep.subr.mxu0 0.0
    %129 = vmatpush1.msra.mxu0 0.0
    %130 = vmatprep.subr.mxu0 0.0
    %131 = vmatpush1.msra.mxu0 0.0
    %132 = vmatprep.subr.mxu0 0.0
    %133 = vmatpush1.msra.mxu0 0.0
    %134 = vmatprep.subr.mxu0 0.0
    %135 = vmatpush1.msra.mxu0 0.0
    %136 = vmatprep.subr.mxu0 0.0
    %137 = vmatpush1.msra.mxu0 0.0
    %138 = vmatprep.mubr.f32.mxu0 0.0
    %139 = vmatmul.mubr.f32.gmra.mrb[0].mxu0 %v72
    %v140 = vpop.f32.mrb[0].mxu0
    %v141 = vadd.f32 0.0, %v140
    %v142 = vpop.f32.mrb[0].mxu0
    %143 = vdwg.mxu0
    %vm144 = vcmask 523264
    %v146 = vsel %vm144, %v55, 0
    %148 = vmatprep.subr.mxu0 0.0
    %149 = vmatpush1.msra.mxu0 %v57
    %150 = vmatprep.subr.mxu0 0.0
    %151 = vmatpush1.msra.mxu0 %v58
    %152 = vmatprep.subr.mxu0 0.0
    %153 = vmatpush1.msra.mxu0 %v59
    %154 = vmatprep.subr.mxu0 0.0
    %155 = vmatpush1.msra.mxu0 %v60
    %156 = vmatprep.subr.mxu0 0.0
    %157 = vmatpush1.msra.mxu0 %v61
    %158 = vmatprep.subr.mxu0 0.0
    %159 = vmatpush1.msra.mxu0 %v62
    %160 = vmatprep.subr.mxu0 0.0
    %161 = vmatpush1.msra.mxu0 %v63
    %162 = vmatprep.subr.mxu0 0.0
    %163 = vmatpush1.msra.mxu0 %v64
    %164 = vmatprep.subr.mxu0 0.0
    %165 = vmatpush1.msra.mxu0 0.0
    %166 = vmatprep.subr.mxu0 0.0
    %167 = vmatpush1.msra.mxu0 0.0
    %168 = vmatprep.subr.mxu0 0.0
    %169 = vmatpush1.msra.mxu0 0.0
    %170 = vmatprep.subr.mxu0 0.0
    %171 = vmatpush1.msra.mxu0 0.0
    %172 = vmatprep.subr.mxu0 0.0
    %173 = vmatpush1.msra.mxu0 0.0
    %174 = vmatprep.subr.mxu0 0.0
    %175 = vmatpush1.msra.mxu0 0.0
    %176 = vmatprep.subr.mxu0 0.0
    %177 = vmatpush1.msra.mxu0 0.0
    %178 = vmatprep.subr.mxu0 0.0
    %179 = vmatpush1.msra.mxu0 0.0
    %180 = vmatprep.subr.mxu0 0.0
    %181 = vmatpush1.msra.mxu0 0.0
    %182 = vmatprep.subr.mxu0 0.0
    %183 = vmatpush1.msra.mxu0 0.0
    %184 = vmatprep.subr.mxu0 0.0
    %185 = vmatpush1.msra.mxu0 0.0
    %186 = vmatprep.subr.mxu0 0.0
    %187 = vmatpush1.msra.mxu0 0.0
    %188 = vmatprep.subr.mxu0 0.0
    %189 = vmatpush1.msra.mxu0 0.0
    %190 = vmatprep.subr.mxu0 0.0
    %191 = vmatpush1.msra.mxu0 0.0
    %192 = vmatprep.subr.mxu0 0.0
    %193 = vmatpush1.msra.mxu0 0.0
    %194 = vmatprep.subr.mxu0 0.0
    %195 = vmatpush1.msra.mxu0 0.0
    %196 = vmatprep.subr.mxu0 0.0
    %197 = vmatpush1.msra.mxu0 0.0
    %198 = vmatprep.subr.mxu0 0.0
    %199 = vmatpush1.msra.mxu0 0.0
    %200 = vmatprep.subr.mxu0 0.0
    %201 = vmatpush1.msra.mxu0 0.0
    %202 = vmatprep.subr.mxu0 0.0
    %203 = vmatpush1.msra.mxu0 0.0
    %204 = vmatprep.subr.mxu0 0.0
    %205 = vmatpush1.msra.mxu0 0.0
    %206 = vmatprep.subr.mxu0 0.0
    %207 = vmatpush1.msra.mxu0 0.0
    %208 = vmatprep.subr.mxu0 0.0
    %209 = vmatpush1.msra.mxu0 0.0
    %210 = vmatprep.subr.mxu0 0.0
    %211 = vmatpush1.msra.mxu0 0.0
    %212 = vmatprep.mubr.f32.mxu0 0.0
    %213 = vmatmul.mubr.f32.gmra.mrb[0].mxu0 %v146
    %v214 = vpop.f32.mrb[0].mxu0
    %v215 = vadd.f32 %v141, %v214
    %v216 = vpop.f32.mrb[0].mxu0
    %217 = vdwg.mxu0
    %v219 = vlaneseq
    %v220 = vshrl.u32 %v219, 7
    %v221 = vsub.s32 0, %v220
    %v222 = vrot.slane %v69, %v221
    %v224 = vadd.f32 %v215, %v222
    %v225 = vxor.u32 %v224, 2147483648
    %v226 = vmul.f32 %v225, 1.442695
    %v227 = vpow.pop %v226
    %v228 = vadd.f32 %v227, 1.0
    %v229 = vrcp.pop %v228
    %v230 = vmul.f32 1.0, %v229
    %232 = vrot.lane.b32.xlu0 %v224, 32
    %v233 = vpop.permute.xlu0 %232
    %v235 = vmul.f32 %v230, %v233
    %237 = vrot.lane.b32.xlu0 %v235, 64
    %v238 = vpop.permute.xlu0 %237
    %v240 = vadd.f32 %v224, %v238
    %v241 = vtanh.pop %v240
    %v242 = vsub.f32 1.0, %v230
    %243 = vrot.lane.b32.xlu0 %v56, 32
    %v244 = vpop.permute.xlu0 %243
    %v246 = vmul.f32 %v242, %v244
    %248 = vrot.lane.b32.xlu0 %v241, 96
    %v249 = vpop.permute.xlu0 %248
    %v251 = vmul.f32 %v230, %v249
    %v252 = vadd.f32 %v246, %v251
    %254 = vrot.lane.b32.xlu0 %v252, 96
    %v255 = vpop.permute.xlu0 %254
    %257 = vst.msk [vmem:[#allocation8] sm:$0xff] %vm70, %v255
    // Predicated region
    $region30: #{tpu_custom_call.1} parent=1 // pred_check
      _
    $region31: #{tpu_custom_call.1} parent=1 // pred_check_branch
      %259 = sbr.rel (0) target = $region33
    $region32: #{tpu_custom_call.1} parent=1 // pred_region
      %s261 = ssub.s32 128, 128
      %262 = vsyncadd [#allocation4], %s261
      %s264 = sshll.u32 [#allocation8], 4
      %s265 = int_to_ptr.vmem [resolvable:$true] %s264
      %267 = dma.vmem_to_hbm [thread:$0]  %s265, 128, %s4, [#allocation4]
    $region33: #{tpu_custom_call.1} parent=1 // pred_fallthru
      _
    // Predicated region
    $region34: #{tpu_custom_call.1} parent=1 // pred_check
      _
    $region35: #{tpu_custom_call.1} parent=1 // pred_check_branch
      %269 = sbr.rel (0) target = $region37
    $region36: #{tpu_custom_call.1} parent=1 // pred_region
      %270 = dma.done [#allocation4], 128
    $region37: #{tpu_custom_call.1} parent=1 // pred_fallthru
      _
    %271 = vsyncpa [#allocation3], 1
    %272 = vsyncpa [#allocation6], 1
    %273 = vsyncpa [#allocation4], 1

</llo_original>
